<compile_context>
chip_gen: v5e
topology: v5e:2x2
jax: 0.10.0
libtpu: 0.0.40
codegen_flags: <defaults>
</compile_context>

<pallas_src>
import functools

import jax
import jax.numpy as jnp
from jax.experimental import pallas as pl
from jax.experimental.pallas import tpu as pltpu


def _round_up(x: int, m: int) -> int:
    return ((x + m - 1) // m) * m


def concat_fusion_kernel(l_ref, a_ref, v_ref, w_ref, b_ref, o_ref, *, d: int):
    """One (tm x tn) output tile: relu(l@Wl + a@Wa + v@Wv + b)."""
    cdt = w_ref.dtype  # bf16 compute dtype for the MXU
    # Static Ref slices of the pre-transposed weight slab [3*D, tn] (zero-cost views).
    wl = w_ref[0 * d:1 * d, :]
    wa = w_ref[1 * d:2 * d, :]
    wv = w_ref[2 * d:3 * d, :]

    # MXU matmuls, bf16 operands, f32 accumulation into a single live acc.
    acc = jnp.dot(l_ref[...].astype(cdt), wl, preferred_element_type=jnp.float32)
    acc += jnp.dot(a_ref[...].astype(cdt), wa, preferred_element_type=jnp.float32)
    acc += jnp.dot(v_ref[...].astype(cdt), wv, preferred_element_type=jnp.float32)

    # Epilogue in f32 on the VPU (bias broadcast over batch + ReLU).
    acc += b_ref[...]
    o_ref[...] = jnp.maximum(acc, 0.0).astype(o_ref.dtype)


def prepare_concat_params(W, b, compute_dtype=jnp.bfloat16):
    """One-time parameter prep (outside the hot path).

    W: PyTorch-layout [out_dim, 3*D] -> transposed, lane-padded bf16 [3*D, Np].
    b: [out_dim]                      -> f32 [1, Np]  (epilogue stays f32).
    """
    out_dim, K = W.shape
    Np = _round_up(out_dim, 128)  # lane-dense output tiles
    W_t = jnp.zeros((K, Np), compute_dtype).at[:, :out_dim].set(
        W.T.astype(compute_dtype))
    b2 = jnp.zeros((1, Np), jnp.float32).at[:, :out_dim].set(
        b.astype(jnp.float32))
    return W_t, b2


def concat_forward(l1, a1, v1, W_t, b2, out_dim):
    """l1, a1, v1: [B, D] f32; W_t: [3*D, Np] bf16 (pre-transposed, padded);
    b2: [1, Np] f32. Returns [B, out_dim] f32."""
    B, D = l1.shape
    K, Np = W_t.shape
    assert K == 3 * D and Np % 128 == 0 and D % 8 == 0

    # Batch tile (multiple of 8 sublanes), capped so double-buffered tiles fit
    # comfortably inside v7x's scoped VMEM.
    tm = min(256, _round_up(B, 8))
    Bp = _round_up(B, tm)
    if Bp != B:  # no-op at the demo shape
        pad = ((0, Bp - B), (0, 0))
        l1, a1, v1 = (jnp.pad(x, pad) for x in (l1, a1, v1))

    # out_dim tile: largest 128-multiple divisor of Np, capped at 512.
    tn = 512 if Np % 512 == 0 else (256 if Np % 256 == 0 else 128)
    tn = min(tn, Np)

    grid = (Bp // tm, Np // tn)

    in_specs = [
        pl.BlockSpec((tm, D), lambda i, j: (i, 0)),   # l1
        pl.BlockSpec((tm, D), lambda i, j: (i, 0)),   # a1
        pl.BlockSpec((tm, D), lambda i, j: (i, 0)),   # v1
        pl.BlockSpec((K, tn), lambda i, j: (0, j)),   # W_t (resident over batch axis)
        pl.BlockSpec((1, tn), lambda i, j: (0, j)),   # bias
    ]
    out_spec = pl.BlockSpec((tm, tn), lambda i, j: (i, j))

    flops = 2 * Bp * K * Np
    bytes_accessed = (3 * Bp * D * 4          # activations (f32 reads)
                      + K * Np * 2            # bf16 weight
                      + Np * 4                # bias
                      + Bp * Np * 4)          # output

    out = pl.pallas_call(
        functools.partial(concat_fusion_kernel, d=D),
        out_shape=jax.ShapeDtypeStruct((Bp, Np), jnp.float32),
        grid=grid,
        in_specs=in_specs,
        out_specs=out_spec,
        compiler_params=pltpu.CompilerParams(
            dimension_semantics=("parallel", "parallel"),
            vmem_limit_bytes=32 * 1024 * 1024,
        ),
        cost_estimate=pl.CostEstimate(
            flops=flops, transcendentals=0, bytes_accessed=bytes_accessed),
    )(l1, a1, v1, W_t, b2)

    return out[:B, :out_dim]


if __name__ == "__main__":
    # Small shapes consistent with concat(in_size=dim, output_dim=dim).
    B = 8    # batch
    D = 32   # in_size == output_dim == dim

    key = jax.random.PRNGKey(0)
    k_l, k_a, k_v, k_w, k_b = jax.random.split(key, 5)

    l1 = jax.random.normal(k_l, (B, D), dtype=jnp.float32)
    a1 = jax.random.normal(k_a, (B, D), dtype=jnp.float32)
    v1 = jax.random.normal(k_v, (B, D), dtype=jnp.float32)

    # Deterministic "nn.Linear(3*D, D)" parameters (PyTorch weight layout [out, in]).
    bound = 1.0 / jnp.sqrt(3.0 * D)
    W = jax.random.uniform(k_w, (D, 3 * D), minval=-bound, maxval=bound,
                           dtype=jnp.float32)
    b = jax.random.uniform(k_b, (D,), minval=-bound, maxval=bound,
                           dtype=jnp.float32)

    # One-time weight prep (transpose + lane-pad + bf16) outside the hot path.
    W_t, b2 = prepare_concat_params(W, b)

    out = concat_forward(l1, a1, v1, W_t, b2, out_dim=D)
    out = jax.block_until_ready(out)

    # Pure-JAX f32 reference of the exact PyTorch semantics.
    ref = jnp.maximum(jnp.concatenate([l1, a1, v1], axis=-1) @ W.T + b, 0.0)
    assert out.shape == (B, D)
    # Tolerance loosened because MXU operands are cast to bf16 (f32 accumulation).
    assert jnp.allclose(out, ref, atol=5e-2, rtol=5e-2)

    print("KERNEL_OK")
</pallas_src>

<mosaic_0001>
module attributes {stable_mosaic.version = 11 : i64} {
  func.func @concat_fusion_kernel(%arg0: i32, %arg1: i32, %arg2: memref<8x32xf32, #tpu.memory_space<vmem>>, %arg3: memref<8x32xf32, #tpu.memory_space<vmem>>, %arg4: memref<8x32xf32, #tpu.memory_space<vmem>>, %arg5: memref<96x128xbf16, #tpu.memory_space<vmem>>, %arg6: memref<1x128xf32, #tpu.memory_space<vmem>>, %arg7: memref<8x128xf32, #tpu.memory_space<vmem>>) attributes {dimension_semantics = [#tpu.dimension_semantics<parallel>, #tpu.dimension_semantics<parallel>], iteration_bounds = array<i64: 1, 1>, scalar_prefetch = 0 : i64, scratch_operands = 0 : i64, tpu.core_type = #tpu.core_type<tc>, window_params = [{transform_indices = @transform_0, window_bounds = array<i64: 8, 32>}, {transform_indices = @transform_1, window_bounds = array<i64: 8, 32>}, {transform_indices = @transform_2, window_bounds = array<i64: 8, 32>}, {transform_indices = @transform_3, window_bounds = array<i64: 96, 128>}, {transform_indices = @transform_4, window_bounds = array<i64: 1, 128>}, {transform_indices = @transform_5, window_bounds = array<i64: 8, 128>}]} {
    %c0 = arith.constant 0 : index
    %c0_0 = arith.constant 0 : index
    %0 = vector.load %arg5[%c0, %c0_0] : memref<96x128xbf16, #tpu.memory_space<vmem>>, vector<32x128xbf16>
    %c32 = arith.constant 32 : index
    %c0_1 = arith.constant 0 : index
    %1 = vector.load %arg5[%c32, %c0_1] : memref<96x128xbf16, #tpu.memory_space<vmem>>, vector<32x128xbf16>
    %c64 = arith.constant 64 : index
    %c0_2 = arith.constant 0 : index
    %2 = vector.load %arg5[%c64, %c0_2] : memref<96x128xbf16, #tpu.memory_space<vmem>>, vector<32x128xbf16>
    %c0_3 = arith.constant 0 : index
    %c0_4 = arith.constant 0 : index
    %3 = vector.load %arg2[%c0_3, %c0_4] : memref<8x32xf32, #tpu.memory_space<vmem>>, vector<8x32xf32>
    %4 = arith.truncf %3 : vector<8x32xf32> to vector<8x32xbf16>
    %cst = arith.constant dense<0.000000e+00> : vector<8x128xf32>
    %5 = tpu.matmul %4, %0, %cst {dimension_numbers = #tpu.dot_dimension_numbers<[1], [0], [0], [1], [0, 0, 1, 1], [], []>} : vector<8x32xbf16>, vector<32x128xbf16>, vector<8x128xf32> -> vector<8x128xf32>
    %c0_5 = arith.constant 0 : index
    %c0_6 = arith.constant 0 : index
    %6 = vector.load %arg3[%c0_5, %c0_6] : memref<8x32xf32, #tpu.memory_space<vmem>>, vector<8x32xf32>
    %7 = arith.truncf %6 : vector<8x32xf32> to vector<8x32xbf16>
    %cst_7 = arith.constant dense<0.000000e+00> : vector<8x128xf32>
    %8 = tpu.matmul %7, %1, %cst_7 {dimension_numbers = #tpu.dot_dimension_numbers<[1], [0], [0], [1], [0, 0, 1, 1], [], []>} : vector<8x32xbf16>, vector<32x128xbf16>, vector<8x128xf32> -> vector<8x128xf32>
    %9 = arith.addf %5, %8 : vector<8x128xf32>
    %c0_8 = arith.constant 0 : index
    %c0_9 = arith.constant 0 : index
    %10 = vector.load %arg4[%c0_8, %c0_9] : memref<8x32xf32, #tpu.memory_space<vmem>>, vector<8x32xf32>
    %11 = arith.truncf %10 : vector<8x32xf32> to vector<8x32xbf16>
    %cst_10 = arith.constant dense<0.000000e+00> : vector<8x128xf32>
    %12 = tpu.matmul %11, %2, %cst_10 {dimension_numbers = #tpu.dot_dimension_numbers<[1], [0], [0], [1], [0, 0, 1, 1], [], []>} : vector<8x32xbf16>, vector<32x128xbf16>, vector<8x128xf32> -> vector<8x128xf32>
    %13 = arith.addf %9, %12 : vector<8x128xf32>
    %c0_11 = arith.constant 0 : index
    %c0_12 = arith.constant 0 : index
    %14 = vector.load %arg6[%c0_11, %c0_12] : memref<1x128xf32, #tpu.memory_space<vmem>>, vector<1x128xf32>
    %15 = vector.broadcast %14 : vector<1x128xf32> to vector<8x128xf32>
    %16 = arith.addf %13, %15 : vector<8x128xf32>
    %cst_13 = arith.constant 0.000000e+00 : f32
    %17 = vector.broadcast %cst_13 : f32 to vector<8x128xf32>
    %18 = arith.maximumf %16, %17 : vector<8x128xf32>
    %c0_14 = arith.constant 0 : index
    %c0_15 = arith.constant 0 : index
    %19 = vector.load %arg7[%c0_14, %c0_15] : memref<8x128xf32, #tpu.memory_space<vmem>>, vector<8x128xf32>
    tpu.vector_store %arg7[%c0_14, %c0_15], %18 {strides = array<i32>} : memref<8x128xf32, #tpu.memory_space<vmem>>, vector<8x128xf32>,
    return
  }
  func.func @transform_0(%arg0: i32, %arg1: i32) -> (i32, i32) {
    %c0_i32 = arith.constant 0 : i32
    %c0_i32_0 = arith.constant 0 : i32
    return %arg0, %c0_i32 : i32, i32
  }
  func.func @transform_1(%arg0: i32, %arg1: i32) -> (i32, i32) {
    %c0_i32 = arith.constant 0 : i32
    %c0_i32_0 = arith.constant 0 : i32
    return %arg0, %c0_i32 : i32, i32
  }
  func.func @transform_2(%arg0: i32, %arg1: i32) -> (i32, i32) {
    %c0_i32 = arith.constant 0 : i32
    %c0_i32_0 = arith.constant 0 : i32
    return %arg0, %c0_i32 : i32, i32
  }
  func.func @transform_3(%arg0: i32, %arg1: i32) -> (i32, i32) {
    %c0_i32 = arith.constant 0 : i32
    %c0_i32_0 = arith.constant 0 : i32
    return %c0_i32, %arg1 : i32, i32
  }
  func.func @transform_4(%arg0: i32, %arg1: i32) -> (i32, i32) {
    %c0_i32 = arith.constant 0 : i32
    %c0_i32_0 = arith.constant 0 : i32
    return %c0_i32, %arg1 : i32, i32
  }
  func.func @transform_5(%arg0: i32, %arg1: i32) -> (i32, i32) {
    %c0_i32 = arith.constant 0 : i32
    return %arg0, %arg1 : i32, i32
  }
}

</mosaic_0001>

<llo_original>
// kernel: tpu_custom_call.1
$region0: #{tpu_custom_call.1}
  #allocation0 [shape = 'u32[]', space=smem, size = 0x4, offset = 0x4, fixed_abs, tag = 'smem constant byte address 0x4 - core index']
  #allocation1 [shape = 'u32[72,128]{1,0:T(1,128)}', space=vmem, size = 0x9000, scoped, tag = 'internal scratch']
  %s0 = inlined_call_operand.hbm [shape: f32[8,32], index: 0, kind: input, shape index: {}]
  %s1 = inlined_call_operand.hbm [shape: f32[8,32], index: 1, kind: input, shape index: {}]
  %s2 = inlined_call_operand.hbm [shape: f32[8,32], index: 2, kind: input, shape index: {}]
  %s3 = inlined_call_operand.hbm [shape: bf16[96,128], index: 3, kind: input, shape index: {}]
  %s4 = inlined_call_operand.vmem [shape: f32[1,128], index: 4, kind: input, shape index: {}]
  %s5 = inlined_call_operand.hbm [shape: f32[8,128], index: 5, kind: output, shape index: {}]
  %s6 = sld [smem:[#allocation0]]
  $region46: #{tpu_custom_call.1} parent=0
    _
  %s8 = ssub.s32 1, %s6
  %s9 = scalar_select 0, %s8, %s6
  $region1: #{tpu_custom_call.1} parent=0
    #allocation2 [shape = 'u8[4096]{0}', space=vmem, size = 0x1000, scoped, tag = 'input window, operand 0, single buffered']
    #allocation3 [shape = 's32[1]{0}', space=sflag, size = 0x4, scoped, tag = 'scoped memory for tpu_custom_call.1']
    #allocation4 [shape = 's32[1]{0}', space=sflag, size = 0x4, scoped, tag = 'scoped memory for tpu_custom_call.1']
    #allocation5 [shape = 'u8[4096]{0}', space=vmem, size = 0x1000, scoped, tag = 'input window, operand 1, single buffered']
    #allocation6 [shape = 's32[1]{0}', space=sflag, size = 0x4, scoped, tag = 'scoped memory for tpu_custom_call.1']
    #allocation7 [shape = 'u8[4096]{0}', space=vmem, size = 0x1000, scoped, tag = 'input window, operand 2, single buffered']
    #allocation8 [shape = 'u8[24576]{0}', space=vmem, size = 0x6000, scoped, tag = 'input window, operand 3, single buffered']
    #allocation9 [shape = 's32[1]{0}', space=sflag, size = 0x4, scoped, tag = 'scoped memory for tpu_custom_call.1']
    #allocation10 [shape = 'u8[4096]{0}', space=vmem, size = 0x1000, scoped, tag = 'output window, operand 0, single buffered']
    %10 = vsyncpa [#allocation3], 0
    %11 = vsyncpa [#allocation6], 0
    %12 = vsyncpa [#allocation9], 0
    %13 = vsyncpa [#allocation4], 0
    // Predicated region
    $region2: #{tpu_custom_call.1} parent=1 // pred_check
      _
    $region3: #{tpu_custom_call.1} parent=1 // pred_check_branch
      %15 = sbr.rel (0) target = $region5
    $region4: #{tpu_custom_call.1} parent=1 // pred_region
      %17 = vsyncadd [#allocation3], 0
      %s19 = sshll.u32 %s0, 4
      %s20 = int_to_ptr.hbm [resolvable:$true] %s19
      %s21 = sshll.u32 [#allocation2], 4
      %s22 = int_to_ptr.vmem [resolvable:$true] %s21
      %24 = dma.hbm_to_vmem [thread:$0]  %s20, 128, %s22, [#allocation3]
    $region5: #{tpu_custom_call.1} parent=1 // pred_fallthru
      _
    // Predicated region
    $region6: #{tpu_custom_call.1} parent=1 // pred_check
      _
    $region7: #{tpu_custom_call.1} parent=1 // pred_check_branch
      %26 = sbr.rel (0) target = $region9
    $region8: #{tpu_custom_call.1} parent=1 // pred_region
      %28 = vsyncadd [#allocation6], 0
      %s30 = sshll.u32 %s1, 4
      %s31 = int_to_ptr.hbm [resolvable:$true] %s30
      %s32 = sshll.u32 [#allocation5], 4
      %s33 = int_to_ptr.vmem [resolvable:$true] %s32
      %35 = dma.hbm_to_vmem [thread:$0]  %s31, 128, %s33, [#allocation6]
    $region9: #{tpu_custom_call.1} parent=1 // pred_fallthru
      _
    // Predicated region
    $region10: #{tpu_custom_call.1} parent=1 // pred_check
      _
    $region11: #{tpu_custom_call.1} parent=1 // pred_check_branch
      %37 = sbr.rel (0) target = $region13
    $region12: #{tpu_custom_call.1} parent=1 // pred_region
      %39 = vsyncadd [#allocation6], 0
      %s41 = sshll.u32 %s2, 4
      %s42 = int_to_ptr.hbm [resolvable:$true] %s41
      %s43 = sshll.u32 [#allocation7], 4
      %s44 = int_to_ptr.vmem [resolvable:$true] %s43
      %46 = dma.hbm_to_vmem [thread:$0]  %s42, 128, %s44, [#allocation6]
    $region13: #{tpu_custom_call.1} parent=1 // pred_fallthru
      _
    // Predicated region
    $region14: #{tpu_custom_call.1} parent=1 // pred_check
      _
    $region15: #{tpu_custom_call.1} parent=1 // pred_check_branch
      %48 = sbr.rel (0) target = $region17
    $region16: #{tpu_custom_call.1} parent=1 // pred_region
      %50 = vsyncadd [#allocation9], 0
      %s51 = sshll.u32 %s3, 4
      %s52 = int_to_ptr.hbm [resolvable:$true] %s51
      %s53 = sshll.u32 [#allocation8], 4
      %s54 = int_to_ptr.vmem [resolvable:$true] %s53
      %59 = dma.hbm_to_vmem [thread:$0]  %s52, 768, %s54, [#allocation9], 64, 64, 4
    $region17: #{tpu_custom_call.1} parent=1 // pred_fallthru
      _
    // Predicated region
    $region18: #{tpu_custom_call.1} parent=1 // pred_check
      _
    $region19: #{tpu_custom_call.1} parent=1 // pred_check_branch
      %61 = sbr.rel (0) target = $region21
    $region20: #{tpu_custom_call.1} parent=1 // pred_region
      _
    $region21: #{tpu_custom_call.1} parent=1 // pred_fallthru
      _
    // Predicated region
    $region22: #{tpu_custom_call.1} parent=1 // pred_check
      _
    $region23: #{tpu_custom_call.1} parent=1 // pred_check_branch
      %63 = sbr.rel (0) target = $region25
    $region24: #{tpu_custom_call.1} parent=1 // pred_region
      %65 = dma.done [#allocation3], 128
    $region25: #{tpu_custom_call.1} parent=1 // pred_fallthru
      _
    // Predicated region
    $region26: #{tpu_custom_call.1} parent=1 // pred_check
      _
    $region27: #{tpu_custom_call.1} parent=1 // pred_check_branch
      %67 = sbr.rel (0) target = $region29
    $region28: #{tpu_custom_call.1} parent=1 // pred_region
      %69 = dma.done [#allocation6], 128
    $region29: #{tpu_custom_call.1} parent=1 // pred_fallthru
      _
    // Predicated region
    $region30: #{tpu_custom_call.1} parent=1 // pred_check
      _
    $region31: #{tpu_custom_call.1} parent=1 // pred_check_branch
      %71 = sbr.rel (0) target = $region33
    $region32: #{tpu_custom_call.1} parent=1 // pred_region
      %73 = dma.done [#allocation6], 128
    $region33: #{tpu_custom_call.1} parent=1 // pred_fallthru
      _
    // Predicated region
    $region34: #{tpu_custom_call.1} parent=1 // pred_check
      _
    $region35: #{tpu_custom_call.1} parent=1 // pred_check_branch
      %75 = sbr.rel (0) target = $region37
    $region36: #{tpu_custom_call.1} parent=1 // pred_region
      %77 = dma.done [#allocation9], 768
    $region37: #{tpu_custom_call.1} parent=1 // pred_fallthru
      _
    %v79 = vld [vmem:[#allocation8] sm:$0xf]
    %v80 = vld [vmem:[#allocation8 + $0x4] sm:$0xf]
    %v81 = vld [vmem:[#allocation8 + $0x8] sm:$0xf]
    %v82 = vld [vmem:[#allocation8 + $0xc] sm:$0xf]
    %v83 = vld [vmem:[#allocation8 + $0x10] sm:$0xf]
    %v84 = vld [vmem:[#allocation8 + $0x14] sm:$0xf]
    %v85 = vld [vmem:[#allocation8 + $0x18] sm:$0xf]
    %v86 = vld [vmem:[#allocation8 + $0x1c] sm:$0xf]
    %v87 = vld [vmem:[#allocation8 + $0x20] sm:$0xf]
    %v88 = vld [vmem:[#allocation8 + $0x24] sm:$0xf]
    %v89 = vld [vmem:[#allocation8 + $0x28] sm:$0xf]
    %v90 = vld [vmem:[#allocation8 + $0x2c] sm:$0xf]
    %v91 = vld [vmem:[#allocation2] sm:$0xff]
    %v92 = vpack.c.bf16 %v91, %v91
    %v93 = vld [vmem:[#allocation5] sm:$0xff]
    %v94 = vpack.c.bf16 %v93, %v93
    %v99 = vunpack.c.l.b16 %v83
    %v100 = vunpack.c.l.b16 %v84
    %v101 = vunpack.c.l.b16 %v85
    %v102 = vunpack.c.l.b16 %v86
    %v103 = vpack.c.b16 %v100, %v99
    %v104 = vpack.c.b16 %v102, %v101
    %vm107 = vcmask 261120
    %v109 = vsel %vm107, %v94, 0
    %111 = vmatpush.bf16.msra.mxu0 0
    %112 = vmatpush.bf16.msra.mxu0 0
    %113 = vmatpush.bf16.msra.mxu0 0
    %114 = vmatpush.bf16.msra.mxu0 0
    %115 = vmatpush.bf16.msra.mxu0 0
    %116 = vmatpush.bf16.msra.mxu0 0
    %117 = vmatpush.bf16.msra.mxu0 %v104
    %118 = vmatpush.bf16.msra.mxu0 %v103
    %119 = vmatmul.bf16.gmra.mxu0 %v109
    %v120 = vpop.f32.mrf.mxu0
    %v121 = vadd.f32 0.0, %v120
    %v122 = vpop.f32.mrf.mxu0
    %123 = vdwg.mxu0
    %v128 = vunpack.c.l.b16 %v79
    %v129 = vunpack.c.l.b16 %v80
    %v130 = vunpack.c.l.b16 %v81
    %v131 = vunpack.c.l.b16 %v82
    %v132 = vpack.c.b16 %v129, %v128
    %v133 = vpack.c.b16 %v131, %v130
    %v137 = vsel %vm107, %v92, 0
    %139 = vmatpush.bf16.msra.mxu0 0
    %140 = vmatpush.bf16.msra.mxu0 0
    %141 = vmatpush.bf16.msra.mxu0 0
    %142 = vmatpush.bf16.msra.mxu0 0
    %143 = vmatpush.bf16.msra.mxu0 0
    %144 = vmatpush.bf16.msra.mxu0 0
    %145 = vmatpush.bf16.msra.mxu0 %v133
    %146 = vmatpush.bf16.msra.mxu0 %v132
    %147 = vmatmul.bf16.gmra.mxu0 %v137
    %v148 = vpop.f32.mrf.mxu0
    %v149 = vadd.f32 %v121, %v148
    %v150 = vpop.f32.mrf.mxu0
    %151 = vdwg.mxu0
    %v152 = vld [vmem:[#allocation7] sm:$0xff]
    %v153 = vpack.c.bf16 %v152, %v152
    %v158 = vunpack.c.l.b16 %v87
    %v159 = vunpack.c.l.b16 %v88
    %v160 = vunpack.c.l.b16 %v89
    %v161 = vunpack.c.l.b16 %v90
    %v162 = vpack.c.b16 %v159, %v158
    %v163 = vpack.c.b16 %v161, %v160
    %v167 = vsel %vm107, %v153, 0
    %169 = vmatpush.bf16.msra.mxu0 0
    %170 = vmatpush.bf16.msra.mxu0 0
    %171 = vmatpush.bf16.msra.mxu0 0
    %172 = vmatpush.bf16.msra.mxu0 0
    %173 = vmatpush.bf16.msra.mxu0 0
    %174 = vmatpush.bf16.msra.mxu0 0
    %175 = vmatpush.bf16.msra.mxu0 %v163
    %176 = vmatpush.bf16.msra.mxu0 %v162
    %177 = vmatmul.bf16.gmra.mxu0 %v167
    %v178 = vpop.f32.mrf.mxu0
    %v179 = vadd.f32 0.0, %v178
    %v180 = vpop.f32.mrf.mxu0
    %181 = vdwg.mxu0
    %v182 = vadd.f32 %v149, %v179
    %v183 = vld [vmem:[%s4] sm:$0x1]
    %v185 = vperm.slane %v183, 0
    %v187 = vadd.f32 %v182, %v185
    %v188 = vmax.f32 %v187, 0.0
    %189 = vst [vmem:[#allocation10] sm:$0xff] %v188
    // Predicated region
    $region38: #{tpu_custom_call.1} parent=1 // pred_check
      _
    $region39: #{tpu_custom_call.1} parent=1 // pred_check_branch
      %191 = sbr.rel (0) target = $region41
    $region40: #{tpu_custom_call.1} parent=1 // pred_region
      %193 = vsyncadd [#allocation4], 0
      %s195 = sshll.u32 [#allocation10], 4
      %s196 = int_to_ptr.vmem [resolvable:$true] %s195
      %s197 = sshll.u32 %s5, 4
      %s198 = int_to_ptr.hbm [resolvable:$true] %s197
      %200 = dma.vmem_to_hbm [thread:$0]  %s196, 128, %s198, [#allocation4]
    $region41: #{tpu_custom_call.1} parent=1 // pred_fallthru
      _
    // Predicated region
    $region42: #{tpu_custom_call.1} parent=1 // pred_check
      _
    $region43: #{tpu_custom_call.1} parent=1 // pred_check_branch
      %202 = sbr.rel (0) target = $region45
    $region44: #{tpu_custom_call.1} parent=1 // pred_region
      %204 = dma.done [#allocation4], 128
    $region45: #{tpu_custom_call.1} parent=1 // pred_fallthru
      _
    %205 = vsyncpa [#allocation3], 1
    %206 = vsyncpa [#allocation6], 1
    %207 = vsyncpa [#allocation9], 1
    %208 = vsyncpa [#allocation4], 1

</llo_original>
